<compile_context>
chip_gen: v7x
topology: tpu7x:2x2x1
jax: 0.10.0
libtpu: 0.0.40
codegen_flags: <defaults>
</compile_context>

<pallas_src>
import math

import jax
import jax.numpy as jnp
from jax.experimental import pallas as pl
from jax.experimental.pallas import tpu as pltpu


LANE = 128      # TPU lane width: feature dims padded to this
SUBLANE = 8     # TPU sublane width: batch padded to a multiple of this


def _round_up(x, m):
    return ((x + m - 1) // m) * m


def make_mlp_kernel(depth: int, compute_dtype=jnp.float32):
    """Pallas kernel: refs are (x, w0, b0, ..., w_{d-1}, b_{d-1}, out).

    Weights arrive pre-transposed as (in_pad_i, out_pad_i); biases as
    (1, out_pad_i) f32. The whole layer stack runs on one row tile of the batch.
    """

    def kernel(x_ref, *rest):
        out_ref = rest[-1]
        prefs = rest[:-1]
        h = x_ref[...]
        for i in range(depth):
            w = prefs[2 * i][...]          # (in_pad_i, out_pad_i) — no .T in kernel
            b = prefs[2 * i + 1][...]      # (1, out_pad_i), f32
            h = jnp.dot(h.astype(compute_dtype), w,
                        preferred_element_type=jnp.float32) + b
            if i < depth - 1:
                # SiLU(x) = x * sigmoid(x), kept exact in f32.
                # (pl.reciprocal(..., approx=True) would push the divide onto the
                #  idle EUP, but the exact form keeps results bit-comparable.)
                h = h * (1.0 / (1.0 + jnp.exp(-h)))
        out_ref[...] = h.astype(out_ref.dtype)

    return kernel


def mlp_forward(x, weights, biases, *, tile_b=256, use_bf16=False, interpret=False):
    """Run the MLP forward pass in a single row-tiled Pallas call.

    x:        (B, in_dim)
    weights:  list of (out_i, in_i) arrays (PyTorch nn.Linear layout)
    biases:   list of (out_i,) arrays
    """
    depth = len(weights)
    B, in_dim = x.shape
    out_dim = weights[-1].shape[0]

    compute_dtype = jnp.bfloat16 if use_bf16 else jnp.float32

    # ---- layout plumbing: paid once, outside the kernel ----------------------
    dims = [in_dim] + [w.shape[0] for w in weights]          # per-layer feature dims
    pdims = [_round_up(d, LANE) for d in dims]                # lane-padded dims

    packed = []
    for i, (w, b) in enumerate(zip(weights, biases)):
        wt = jnp.zeros((pdims[i], pdims[i + 1]), compute_dtype)
        wt = wt.at[: dims[i], : dims[i + 1]].set(w.T.astype(compute_dtype))
        bp = jnp.zeros((1, pdims[i + 1]), jnp.float32)
        bp = bp.at[:, : dims[i + 1]].set(b.astype(jnp.float32))
        packed.extend([wt, bp])

    # Row tiling: tile_b a multiple of 8, batch zero-padded up to a multiple of it.
    tile_b = max(SUBLANE, min(_round_up(tile_b, SUBLANE), _round_up(B, SUBLANE)))
    Bp = _round_up(B, tile_b)
    xp = jnp.zeros((Bp, pdims[0]), x.dtype).at[:B, :in_dim].set(x)

    grid = (Bp // tile_b,)

    in_specs = [pl.BlockSpec((tile_b, pdims[0]), lambda i: (i, 0))]
    for li in range(depth):
        # Constant index_map: weights/biases DMA'd once, resident across batch tiles.
        in_specs.append(pl.BlockSpec((pdims[li], pdims[li + 1]), lambda i: (0, 0)))
        in_specs.append(pl.BlockSpec((1, pdims[li + 1]), lambda i: (0, 0)))
    out_spec = pl.BlockSpec((tile_b, pdims[-1]), lambda i: (i, 0))

    # Advisory cost estimate so XLA schedules this small custom call correctly.
    flops = 2 * Bp * sum(pdims[i] * pdims[i + 1] for i in range(depth))
    transcendentals = Bp * sum(pdims[i + 1] for i in range(depth - 1))
    bytes_accessed = (
        xp.size * xp.dtype.itemsize
        + sum(a.size * a.dtype.itemsize for a in packed)
        + Bp * pdims[-1] * 4
    )

    out_padded = pl.pallas_call(
        make_mlp_kernel(depth, compute_dtype),
        out_shape=jax.ShapeDtypeStruct((Bp, pdims[-1]), jnp.float32),
        grid=grid,
        in_specs=in_specs,
        out_specs=out_spec,
        compiler_params=pltpu.CompilerParams(
            dimension_semantics=("parallel",),   # shard batch tiles across v7x's 2 TCs
        ),
        cost_estimate=pl.CostEstimate(
            flops=flops,
            transcendentals=transcendentals,
            bytes_accessed=bytes_accessed,
        ),
        interpret=interpret,
    )(xp, *packed)

    return out_padded[:B, :out_dim].astype(x.dtype)


def init_mlp_params(key, shp):
    """Deterministic init mimicking nn.Linear (uniform(-1/sqrt(in), 1/sqrt(in)))."""
    weights, biases = [], []
    for i in range(len(shp) - 1):
        fan_in, fan_out = shp[i], shp[i + 1]
        bound = 1.0 / math.sqrt(fan_in)
        key, kw, kb = jax.random.split(key, 3)
        w = jax.random.uniform(kw, (fan_out, fan_in), jnp.float32, -bound, bound)
        b = jax.random.uniform(kb, (fan_out,), jnp.float32, -bound, bound)
        weights.append(w)
        biases.append(b)
    return key, weights, biases


def mlp_reference(x, weights, biases):
    """Pure-JAX reference mirroring MLP.forward."""
    depth = len(weights)
    h = x
    for i in range(depth):
        h = h @ weights[i].T + biases[i]
        if i < depth - 1:
            h = jax.nn.silu(h)
    return h


if __name__ == "__main__":
    # shp = [in_dim] + [w]*(depth-1) + [out_dim], consistent with the module.
    p = 59
    in_dim, w, out_dim, depth = 32, 32, 32, 3
    shp = [in_dim] + [w] * (depth - 1) + [out_dim]

    key = jax.random.PRNGKey(0)
    key, weights, biases = init_mlp_params(key, shp)

    # self.embedding = Parameter(normal(0, 1, size=(p, in_dim))) — unused in forward().
    key, kemb, kx = jax.random.split(key, 3)
    embedding = jax.random.normal(kemb, (p, in_dim), jnp.float32)  # shape fidelity only

    # Small sanity batch (single grid step).
    batch = 8
    x = jax.random.normal(kx, (batch, in_dim), jnp.float32)
    out = jax.block_until_ready(mlp_forward(x, weights, biases))
    ref = mlp_reference(x, weights, biases)
    assert out.shape == (batch, out_dim)
    assert jnp.allclose(out, ref, atol=1e-5, rtol=1e-5), "Pallas MLP mismatch (small batch)"

    # Larger batch exercising the row-tiled grid (non-multiple of the tile on
    # purpose), e.g. a chunk of the p*p loss-surface evaluation in one call.
    key, kx2 = jax.random.split(key)
    batch2 = 600
    x2 = jax.random.normal(kx2, (batch2, in_dim), jnp.float32)
    out2 = jax.block_until_ready(mlp_forward(x2, weights, biases, tile_b=256))
    ref2 = mlp_reference(x2, weights, biases)
    assert out2.shape == (batch2, out_dim)
    assert jnp.allclose(out2, ref2, atol=1e-5, rtol=1e-5), "Pallas MLP mismatch (tiled batch)"

    print("KERNEL_OK")
</pallas_src>

<mosaic_0001>
module attributes {stable_mosaic.version = 11 : i64} {
  func.func @kernel(%arg0: i32, %arg1: memref<8x128xf32, #tpu.memory_space<vmem>>, %arg2: memref<128x128xf32, #tpu.memory_space<vmem>>, %arg3: memref<1x128xf32, #tpu.memory_space<vmem>>, %arg4: memref<128x128xf32, #tpu.memory_space<vmem>>, %arg5: memref<1x128xf32, #tpu.memory_space<vmem>>, %arg6: memref<128x128xf32, #tpu.memory_space<vmem>>, %arg7: memref<1x128xf32, #tpu.memory_space<vmem>>, %arg8: memref<8x128xf32, #tpu.memory_space<vmem>>) attributes {dimension_semantics = [#tpu.dimension_semantics<parallel>], iteration_bounds = array<i64: 1>, scalar_prefetch = 0 : i64, scratch_operands = 0 : i64, tpu.core_type = #tpu.core_type<tc>, window_params = [{transform_indices = @transform_0, window_bounds = array<i64: 8, 128>}, {pipeline_mode = #tpu.pipeline_mode<synchronous>, transform_indices = @transform_1, window_bounds = array<i64: 128, 128>}, {pipeline_mode = #tpu.pipeline_mode<synchronous>, transform_indices = @transform_2, window_bounds = array<i64: 1, 128>}, {pipeline_mode = #tpu.pipeline_mode<synchronous>, transform_indices = @transform_3, window_bounds = array<i64: 128, 128>}, {pipeline_mode = #tpu.pipeline_mode<synchronous>, transform_indices = @transform_4, window_bounds = array<i64: 1, 128>}, {pipeline_mode = #tpu.pipeline_mode<synchronous>, transform_indices = @transform_5, window_bounds = array<i64: 128, 128>}, {pipeline_mode = #tpu.pipeline_mode<synchronous>, transform_indices = @transform_6, window_bounds = array<i64: 1, 128>}, {transform_indices = @transform_7, window_bounds = array<i64: 8, 128>}]} {
    %c0 = arith.constant 0 : index
    %c0_0 = arith.constant 0 : index
    %0 = vector.load %arg1[%c0, %c0_0] : memref<8x128xf32, #tpu.memory_space<vmem>>, vector<8x128xf32>
    %c0_1 = arith.constant 0 : index
    %c0_2 = arith.constant 0 : index
    %1 = vector.load %arg2[%c0_1, %c0_2] : memref<128x128xf32, #tpu.memory_space<vmem>>, vector<128x128xf32>
    %c0_3 = arith.constant 0 : index
    %c0_4 = arith.constant 0 : index
    %2 = vector.load %arg3[%c0_3, %c0_4] : memref<1x128xf32, #tpu.memory_space<vmem>>, vector<1x128xf32>
    %cst = arith.constant dense<0.000000e+00> : vector<8x128xf32>
    %3 = tpu.matmul %0, %1, %cst {dimension_numbers = #tpu.dot_dimension_numbers<[1], [0], [0], [1], [0, 0, 1, 1], [], []>} : vector<8x128xf32>, vector<128x128xf32>, vector<8x128xf32> -> vector<8x128xf32>
    %4 = vector.broadcast %2 : vector<1x128xf32> to vector<8x128xf32>
    %5 = arith.addf %3, %4 : vector<8x128xf32>
    %cst_5 = arith.constant 0.000000e+00 : f32
    %6 = vector.broadcast %cst_5 : f32 to vector<8x128xf32>
    %7 = arith.subf %6, %5 : vector<8x128xf32>
    %8 = math.exp %7 : vector<8x128xf32>
    %cst_6 = arith.constant 1.000000e+00 : f32
    %9 = vector.broadcast %cst_6 : f32 to vector<8x128xf32>
    %10 = arith.addf %9, %8 : vector<8x128xf32>
    %cst_7 = arith.constant 1.000000e+00 : f32
    %11 = vector.broadcast %cst_7 : f32 to vector<8x128xf32>
    %12 = arith.divf %11, %10 : vector<8x128xf32>
    %13 = arith.mulf %5, %12 : vector<8x128xf32>
    %c0_8 = arith.constant 0 : index
    %c0_9 = arith.constant 0 : index
    %14 = vector.load %arg4[%c0_8, %c0_9] : memref<128x128xf32, #tpu.memory_space<vmem>>, vector<128x128xf32>
    %c0_10 = arith.constant 0 : index
    %c0_11 = arith.constant 0 : index
    %15 = vector.load %arg5[%c0_10, %c0_11] : memref<1x128xf32, #tpu.memory_space<vmem>>, vector<1x128xf32>
    %cst_12 = arith.constant dense<0.000000e+00> : vector<8x128xf32>
    %16 = tpu.matmul %13, %14, %cst_12 {dimension_numbers = #tpu.dot_dimension_numbers<[1], [0], [0], [1], [0, 0, 1, 1], [], []>} : vector<8x128xf32>, vector<128x128xf32>, vector<8x128xf32> -> vector<8x128xf32>
    %17 = vector.broadcast %15 : vector<1x128xf32> to vector<8x128xf32>
    %18 = arith.addf %16, %17 : vector<8x128xf32>
    %cst_13 = arith.constant 0.000000e+00 : f32
    %19 = vector.broadcast %cst_13 : f32 to vector<8x128xf32>
    %20 = arith.subf %19, %18 : vector<8x128xf32>
    %21 = math.exp %20 : vector<8x128xf32>
    %cst_14 = arith.constant 1.000000e+00 : f32
    %22 = vector.broadcast %cst_14 : f32 to vector<8x128xf32>
    %23 = arith.addf %22, %21 : vector<8x128xf32>
    %cst_15 = arith.constant 1.000000e+00 : f32
    %24 = vector.broadcast %cst_15 : f32 to vector<8x128xf32>
    %25 = arith.divf %24, %23 : vector<8x128xf32>
    %26 = arith.mulf %18, %25 : vector<8x128xf32>
    %c0_16 = arith.constant 0 : index
    %c0_17 = arith.constant 0 : index
    %27 = vector.load %arg6[%c0_16, %c0_17] : memref<128x128xf32, #tpu.memory_space<vmem>>, vector<128x128xf32>
    %c0_18 = arith.constant 0 : index
    %c0_19 = arith.constant 0 : index
    %28 = vector.load %arg7[%c0_18, %c0_19] : memref<1x128xf32, #tpu.memory_space<vmem>>, vector<1x128xf32>
    %cst_20 = arith.constant dense<0.000000e+00> : vector<8x128xf32>
    %29 = tpu.matmul %26, %27, %cst_20 {dimension_numbers = #tpu.dot_dimension_numbers<[1], [0], [0], [1], [0, 0, 1, 1], [], []>} : vector<8x128xf32>, vector<128x128xf32>, vector<8x128xf32> -> vector<8x128xf32>
    %30 = vector.broadcast %28 : vector<1x128xf32> to vector<8x128xf32>
    %31 = arith.addf %29, %30 : vector<8x128xf32>
    %c0_21 = arith.constant 0 : index
    %c0_22 = arith.constant 0 : index
    %32 = vector.load %arg8[%c0_21, %c0_22] : memref<8x128xf32, #tpu.memory_space<vmem>>, vector<8x128xf32>
    tpu.vector_store %arg8[%c0_21, %c0_22], %31 {strides = array<i32>} : memref<8x128xf32, #tpu.memory_space<vmem>>, vector<8x128xf32>,
    return
  }
  func.func @transform_0(%arg0: i32) -> (i32, i32) {
    %c0_i32 = arith.constant 0 : i32
    %c0_i32_0 = arith.constant 0 : i32
    return %arg0, %c0_i32 : i32, i32
  }
  func.func @transform_1(%arg0: i32) -> (i32, i32) {
    %c0_i32 = arith.constant 0 : i32
    %c0_i32_0 = arith.constant 0 : i32
    %c0_i32_1 = arith.constant 0 : i32
    return %c0_i32, %c0_i32_0 : i32, i32
  }
  func.func @transform_2(%arg0: i32) -> (i32, i32) {
    %c0_i32 = arith.constant 0 : i32
    %c0_i32_0 = arith.constant 0 : i32
    %c0_i32_1 = arith.constant 0 : i32
    return %c0_i32, %c0_i32_0 : i32, i32
  }
  func.func @transform_3(%arg0: i32) -> (i32, i32) {
    %c0_i32 = arith.constant 0 : i32
    %c0_i32_0 = arith.constant 0 : i32
    %c0_i32_1 = arith.constant 0 : i32
    return %c0_i32, %c0_i32_0 : i32, i32
  }
  func.func @transform_4(%arg0: i32) -> (i32, i32) {
    %c0_i32 = arith.constant 0 : i32
    %c0_i32_0 = arith.constant 0 : i32
    %c0_i32_1 = arith.constant 0 : i32
    return %c0_i32, %c0_i32_0 : i32, i32
  }
  func.func @transform_5(%arg0: i32) -> (i32, i32) {
    %c0_i32 = arith.constant 0 : i32
    %c0_i32_0 = arith.constant 0 : i32
    %c0_i32_1 = arith.constant 0 : i32
    return %c0_i32, %c0_i32_0 : i32, i32
  }
  func.func @transform_6(%arg0: i32) -> (i32, i32) {
    %c0_i32 = arith.constant 0 : i32
    %c0_i32_0 = arith.constant 0 : i32
    %c0_i32_1 = arith.constant 0 : i32
    return %c0_i32, %c0_i32_0 : i32, i32
  }
  func.func @transform_7(%arg0: i32) -> (i32, i32) {
    %c0_i32 = arith.constant 0 : i32
    %c0_i32_0 = arith.constant 0 : i32
    return %arg0, %c0_i32 : i32, i32
  }
}

</mosaic_0001>

<llo_original>
// kernel: tpu_custom_call.1
$region0: #{tpu_custom_call.1}
  #allocation0 [shape = 'u32[]', space=smem, size = 0x4, offset = 0x4, fixed_abs, tag = 'smem constant byte address 0x4 - core index']
  #allocation1 [shape = 'u32[144,128]{1,0:T(1,128)}', space=vmem, size = 0x12000, scoped, tag = 'internal scratch']
  %s0 = inlined_call_operand.hbm [shape: f32[8,128], index: 0, kind: input, shape index: {}]
  %s1 = inlined_call_operand.hbm [shape: f32[128,128], index: 1, kind: input, shape index: {}]
  %s2 = inlined_call_operand.vmem [shape: f32[1,128], index: 2, kind: input, shape index: {}]
  %s3 = inlined_call_operand.hbm [shape: f32[128,128], index: 3, kind: input, shape index: {}]
  %s4 = inlined_call_operand.vmem [shape: f32[1,128], index: 4, kind: input, shape index: {}]
  %s5 = inlined_call_operand.hbm [shape: f32[128,128], index: 5, kind: input, shape index: {}]
  %s6 = inlined_call_operand.vmem [shape: f32[1,128], index: 6, kind: input, shape index: {}]
  %s7 = inlined_call_operand.hbm [shape: f32[8,128], index: 7, kind: output, shape index: {}]
  %s8 = sld [smem:[#allocation0]]
  $region54: #{tpu_custom_call.1} parent=0
    _
  %s10 = ssub.s32 1, %s8
  %s11 = scalar_select 0, %s10, %s8
  $region1: #{tpu_custom_call.1} parent=0
    #allocation2 [shape = 'u8[4096]{0}', space=vmem, size = 0x1000, scoped, tag = 'input window, operand 0, single buffered']
    #allocation3 [shape = 's32[1]{0}', space=sflag, size = 0x4, scoped, tag = 'scoped memory for tpu_custom_call.1']
    #allocation4 [shape = 's32[1]{0}', space=sflag, size = 0x4, scoped, tag = 'scoped memory for tpu_custom_call.1']
    #allocation5 [shape = 'u8[65536]{0}', space=vmem, size = 0x10000, scoped, tag = 'input window, operand 1, single buffered']
    #allocation6 [shape = 's32[1]{0}', space=sflag, size = 0x4, scoped, tag = 'scoped memory for tpu_custom_call.1']
    #allocation7 [shape = 'u8[65536]{0}', space=vmem, size = 0x10000, scoped, tag = 'input window, operand 3, single buffered']
    #allocation8 [shape = 'u8[65536]{0}', space=vmem, size = 0x10000, scoped, tag = 'input window, operand 5, single buffered']
    #allocation9 [shape = 's32[1]{0}', space=sflag, size = 0x4, scoped, tag = 'scoped memory for tpu_custom_call.1']
    #allocation10 [shape = 'u8[4096]{0}', space=vmem, size = 0x1000, scoped, tag = 'output window, operand 0, single buffered']
    %12 = vsyncpa [#allocation3], 0
    %13 = vsyncpa [#allocation6], 0
    %14 = vsyncpa [#allocation9], 0
    %15 = vsyncpa [#allocation4], 0
    // Predicated region
    $region2: #{tpu_custom_call.1} parent=1 // pred_check
      _
    $region3: #{tpu_custom_call.1} parent=1 // pred_check_branch
      %17 = sbr.rel (0) target = $region5
    $region4: #{tpu_custom_call.1} parent=1 // pred_region
      %s19 = ssub.s32 128, 128
      %20 = vsyncadd [#allocation3], %s19
      %s22 = sshll.u32 [#allocation2], 4
      %s23 = int_to_ptr.vmem [resolvable:$true] %s22
      %25 = dma.hbm_to_vmem [thread:$0]  %s0, 128, %s23, [#allocation3]
    $region5: #{tpu_custom_call.1} parent=1 // pred_fallthru
      _
    // Predicated region
    $region6: #{tpu_custom_call.1} parent=1 // pred_check
      _
    $region7: #{tpu_custom_call.1} parent=1 // pred_check_branch
      %27 = sbr.rel (0) target = $region9
    $region8: #{tpu_custom_call.1} parent=1 // pred_region
      %s29 = ssub.s32 2048, 2048
      %30 = vsyncadd [#allocation6], %s29
      %s31 = sshll.u32 [#allocation5], 4
      %s32 = int_to_ptr.vmem [resolvable:$true] %s31
      %37 = dma.hbm_to_vmem [thread:$0]  %s1, 2048, %s32, [#allocation6], 128, 128, 8
    $region9: #{tpu_custom_call.1} parent=1 // pred_fallthru
      _
    // Predicated region
    $region10: #{tpu_custom_call.1} parent=1 // pred_check
      _
    $region11: #{tpu_custom_call.1} parent=1 // pred_check_branch
      %39 = sbr.rel (0) target = $region13
    $region12: #{tpu_custom_call.1} parent=1 // pred_region
      _
    $region13: #{tpu_custom_call.1} parent=1 // pred_fallthru
      _
    // Predicated region
    $region14: #{tpu_custom_call.1} parent=1 // pred_check
      _
    $region15: #{tpu_custom_call.1} parent=1 // pred_check_branch
      %41 = sbr.rel (0) target = $region17
    $region16: #{tpu_custom_call.1} parent=1 // pred_region
      %s43 = ssub.s32 2048, 2048
      %44 = vsyncadd [#allocation6], %s43
      %s45 = sshll.u32 [#allocation7], 4
      %s46 = int_to_ptr.vmem [resolvable:$true] %s45
      %51 = dma.hbm_to_vmem [thread:$0]  %s3, 2048, %s46, [#allocation6], 128, 128, 8
    $region17: #{tpu_custom_call.1} parent=1 // pred_fallthru
      _
    // Predicated region
    $region18: #{tpu_custom_call.1} parent=1 // pred_check
      _
    $region19: #{tpu_custom_call.1} parent=1 // pred_check_branch
      %53 = sbr.rel (0) target = $region21
    $region20: #{tpu_custom_call.1} parent=1 // pred_region
      _
    $region21: #{tpu_custom_call.1} parent=1 // pred_fallthru
      _
    // Predicated region
    $region22: #{tpu_custom_call.1} parent=1 // pred_check
      _
    $region23: #{tpu_custom_call.1} parent=1 // pred_check_branch
      %55 = sbr.rel (0) target = $region25
    $region24: #{tpu_custom_call.1} parent=1 // pred_region
      %s57 = ssub.s32 2048, 2048
      %58 = vsyncadd [#allocation9], %s57
      %s59 = sshll.u32 [#allocation8], 4
      %s60 = int_to_ptr.vmem [resolvable:$true] %s59
      %65 = dma.hbm_to_vmem [thread:$0]  %s5, 2048, %s60, [#allocation9], 128, 128, 8
    $region25: #{tpu_custom_call.1} parent=1 // pred_fallthru
      _
    // Predicated region
    $region26: #{tpu_custom_call.1} parent=1 // pred_check
      _
    $region27: #{tpu_custom_call.1} parent=1 // pred_check_branch
      %67 = sbr.rel (0) target = $region29
    $region28: #{tpu_custom_call.1} parent=1 // pred_region
      _
    $region29: #{tpu_custom_call.1} parent=1 // pred_fallthru
      _
    // Predicated region
    $region30: #{tpu_custom_call.1} parent=1 // pred_check
      _
    $region31: #{tpu_custom_call.1} parent=1 // pred_check_branch
      %69 = sbr.rel (0) target = $region33
    $region32: #{tpu_custom_call.1} parent=1 // pred_region
      %70 = dma.done [#allocation3], 128
    $region33: #{tpu_custom_call.1} parent=1 // pred_fallthru
      _
    // Predicated region
    $region34: #{tpu_custom_call.1} parent=1 // pred_check
      _
    $region35: #{tpu_custom_call.1} parent=1 // pred_check_branch
      %72 = sbr.rel (0) target = $region37
    $region36: #{tpu_custom_call.1} parent=1 // pred_region
      %73 = dma.done [#allocation6], 2048
    $region37: #{tpu_custom_call.1} parent=1 // pred_fallthru
      _
    // Predicated region
    $region38: #{tpu_custom_call.1} parent=1 // pred_check
      _
    $region39: #{tpu_custom_call.1} parent=1 // pred_check_branch
      %75 = sbr.rel (0) target = $region41
    $region40: #{tpu_custom_call.1} parent=1 // pred_region
      %76 = dma.done [#allocation6], 2048
    $region41: #{tpu_custom_call.1} parent=1 // pred_fallthru
      _
    // Predicated region
    $region42: #{tpu_custom_call.1} parent=1 // pred_check
      _
    $region43: #{tpu_custom_call.1} parent=1 // pred_check_branch
      %78 = sbr.rel (0) target = $region45
    $region44: #{tpu_custom_call.1} parent=1 // pred_region
      %79 = dma.done [#allocation9], 2048
    $region45: #{tpu_custom_call.1} parent=1 // pred_fallthru
      _
    %v80 = vld [vmem:[#allocation2] sm:$0xff]
    %v81 = vld [vmem:[#allocation5] sm:$0xff]
    %v82 = vld [vmem:[#allocation5 + $0x8] sm:$0xff]
    %v83 = vld [vmem:[#allocation5 + $0x10] sm:$0xff]
    %v84 = vld [vmem:[#allocation5 + $0x18] sm:$0xff]
    %v85 = vld [vmem:[#allocation5 + $0x20] sm:$0xff]
    %v86 = vld [vmem:[#allocation5 + $0x28] sm:$0xff]
    %v87 = vld [vmem:[#allocation5 + $0x30] sm:$0xff]
    %v88 = vld [vmem:[#allocation5 + $0x38] sm:$0xff]
    %v89 = vld [vmem:[#allocation5 + $0x40] sm:$0xff]
    %v90 = vld [vmem:[#allocation5 + $0x48] sm:$0xff]
    %v91 = vld [vmem:[#allocation5 + $0x50] sm:$0xff]
    %v92 = vld [vmem:[#allocation5 + $0x58] sm:$0xff]
    %v93 = vld [vmem:[#allocation5 + $0x60] sm:$0xff]
    %v94 = vld [vmem:[#allocation5 + $0x68] sm:$0xff]
    %v95 = vld [vmem:[#allocation5 + $0x70] sm:$0xff]
    %v96 = vld [vmem:[#allocation5 + $0x78] sm:$0xff]
    %v97 = vld [vmem:[%s2] sm:$0x1]
    %v99 = vlaneseq
    %v100 = vshrl.u32 %v99, 7
    %v101 = vsub.s32 0, %v100
    %v102 = vrot.slane %v97, %v101
    %104 = vmatprep.subr.mxu0 0.0
    %105 = vmatpush1.msra.mxu0 %v81
    %106 = vmatprep.subr.mxu0 0.0
    %107 = vmatpush1.msra.mxu0 %v82
    %108 = vmatprep.subr.mxu0 0.0
    %109 = vmatpush1.msra.mxu0 %v83
    %110 = vmatprep.subr.mxu0 0.0
    %111 = vmatpush1.msra.mxu0 %v84
    %112 = vmatprep.subr.mxu0 0.0
    %113 = vmatpush1.msra.mxu0 %v85
    %114 = vmatprep.subr.mxu0 0.0
    %115 = vmatpush1.msra.mxu0 %v86
    %116 = vmatprep.subr.mxu0 0.0
    %117 = vmatpush1.msra.mxu0 %v87
    %118 = vmatprep.subr.mxu0 0.0
    %119 = vmatpush1.msra.mxu0 %v88
    %120 = vmatprep.subr.mxu0 0.0
    %121 = vmatpush1.msra.mxu0 %v89
    %122 = vmatprep.subr.mxu0 0.0
    %123 = vmatpush1.msra.mxu0 %v90
    %124 = vmatprep.subr.mxu0 0.0
    %125 = vmatpush1.msra.mxu0 %v91
    %126 = vmatprep.subr.mxu0 0.0
    %127 = vmatpush1.msra.mxu0 %v92
    %128 = vmatprep.subr.mxu0 0.0
    %129 = vmatpush1.msra.mxu0 %v93
    %130 = vmatprep.subr.mxu0 0.0
    %131 = vmatpush1.msra.mxu0 %v94
    %132 = vmatprep.subr.mxu0 0.0
    %133 = vmatpush1.msra.mxu0 %v95
    %134 = vmatprep.subr.mxu0 0.0
    %135 = vmatpush1.msra.mxu0 %v96
    %136 = vmatprep.subr.mxu0 0.0
    %137 = vmatpush1.msra.mxu0 0.0
    %138 = vmatprep.subr.mxu0 0.0
    %139 = vmatpush1.msra.mxu0 0.0
    %140 = vmatprep.subr.mxu0 0.0
    %141 = vmatpush1.msra.mxu0 0.0
    %142 = vmatprep.subr.mxu0 0.0
    %143 = vmatpush1.msra.mxu0 0.0
    %144 = vmatprep.subr.mxu0 0.0
    %145 = vmatpush1.msra.mxu0 0.0
    %146 = vmatprep.subr.mxu0 0.0
    %147 = vmatpush1.msra.mxu0 0.0
    %148 = vmatprep.subr.mxu0 0.0
    %149 = vmatpush1.msra.mxu0 0.0
    %150 = vmatprep.subr.mxu0 0.0
    %151 = vmatpush1.msra.mxu0 0.0
    %152 = vmatprep.subr.mxu0 0.0
    %153 = vmatpush1.msra.mxu0 0.0
    %154 = vmatprep.subr.mxu0 0.0
    %155 = vmatpush1.msra.mxu0 0.0
    %156 = vmatprep.subr.mxu0 0.0
    %157 = vmatpush1.msra.mxu0 0.0
    %158 = vmatprep.subr.mxu0 0.0
    %159 = vmatpush1.msra.mxu0 0.0
    %160 = vmatprep.subr.mxu0 0.0
    %161 = vmatpush1.msra.mxu0 0.0
    %162 = vmatprep.subr.mxu0 0.0
    %163 = vmatpush1.msra.mxu0 0.0
    %164 = vmatprep.subr.mxu0 0.0
    %165 = vmatpush1.msra.mxu0 0.0
    %166 = vmatprep.subr.mxu0 0.0
    %167 = vmatpush1.msra.mxu0 0.0
    %168 = vmatprep.mubr.f32.mxu0 0.0
    %169 = vmatmul.mubr.f32.gmra.mrb[0].mxu0 %v80
    %v170 = vpop.f32.mrb[0].mxu0
    %v171 = vadd.f32 %v102, %v170
    %v172 = vpop.f32.mrb[0].mxu0
    %173 = vdwg.mxu0
    %v174 = vsub.f32 0.0, %v171
    %v175 = vmul.f32 %v174, 1.442695
    %v176 = vpow.pop %v175
    %v177 = vadd.f32 %v176, 1.0
    %v178 = vrcp.pop %v177
    %v179 = vmul.f32 1.0, %v178
    %v180 = vmul.f32 %v171, %v179
    %v181 = vld [vmem:[#allocation7] sm:$0xff]
    %v182 = vld [vmem:[#allocation7 + $0x8] sm:$0xff]
    %v183 = vld [vmem:[#allocation7 + $0x10] sm:$0xff]
    %v184 = vld [vmem:[#allocation7 + $0x18] sm:$0xff]
    %v185 = vld [vmem:[#allocation7 + $0x20] sm:$0xff]
    %v186 = vld [vmem:[#allocation7 + $0x28] sm:$0xff]
    %v187 = vld [vmem:[#allocation7 + $0x30] sm:$0xff]
    %v188 = vld [vmem:[#allocation7 + $0x38] sm:$0xff]
    %v189 = vld [vmem:[#allocation7 + $0x40] sm:$0xff]
    %v190 = vld [vmem:[#allocation7 + $0x48] sm:$0xff]
    %v191 = vld [vmem:[#allocation7 + $0x50] sm:$0xff]
    %v192 = vld [vmem:[#allocation7 + $0x58] sm:$0xff]
    %v193 = vld [vmem:[#allocation7 + $0x60] sm:$0xff]
    %v194 = vld [vmem:[#allocation7 + $0x68] sm:$0xff]
    %v195 = vld [vmem:[#allocation7 + $0x70] sm:$0xff]
    %v196 = vld [vmem:[#allocation7 + $0x78] sm:$0xff]
    %v197 = vld [vmem:[%s4] sm:$0x1]
    %v199 = vlaneseq
    %v200 = vshrl.u32 %v199, 7
    %v201 = vsub.s32 0, %v200
    %v202 = vrot.slane %v197, %v201
    %204 = vmatprep.subr.mxu0 0.0
    %205 = vmatpush1.msra.mxu0 %v181
    %206 = vmatprep.subr.mxu0 0.0
    %207 = vmatpush1.msra.mxu0 %v182
    %208 = vmatprep.subr.mxu0 0.0
    %209 = vmatpush1.msra.mxu0 %v183
    %210 = vmatprep.subr.mxu0 0.0
    %211 = vmatpush1.msra.mxu0 %v184
    %212 = vmatprep.subr.mxu0 0.0
    %213 = vmatpush1.msra.mxu0 %v185
    %214 = vmatprep.subr.mxu0 0.0
    %215 = vmatpush1.msra.mxu0 %v186
    %216 = vmatprep.subr.mxu0 0.0
    %217 = vmatpush1.msra.mxu0 %v187
    %218 = vmatprep.subr.mxu0 0.0
    %219 = vmatpush1.msra.mxu0 %v188
    %220 = vmatprep.subr.mxu0 0.0
    %221 = vmatpush1.msra.mxu0 %v189
    %222 = vmatprep.subr.mxu0 0.0
    %223 = vmatpush1.msra.mxu0 %v190
    %224 = vmatprep.subr.mxu0 0.0
    %225 = vmatpush1.msra.mxu0 %v191
    %226 = vmatprep.subr.mxu0 0.0
    %227 = vmatpush1.msra.mxu0 %v192
    %228 = vmatprep.subr.mxu0 0.0
    %229 = vmatpush1.msra.mxu0 %v193
    %230 = vmatprep.subr.mxu0 0.0
    %231 = vmatpush1.msra.mxu0 %v194
    %232 = vmatprep.subr.mxu0 0.0
    %233 = vmatpush1.msra.mxu0 %v195
    %234 = vmatprep.subr.mxu0 0.0
    %235 = vmatpush1.msra.mxu0 %v196
    %236 = vmatprep.subr.mxu0 0.0
    %237 = vmatpush1.msra.mxu0 0.0
    %238 = vmatprep.subr.mxu0 0.0
    %239 = vmatpush1.msra.mxu0 0.0
    %240 = vmatprep.subr.mxu0 0.0
    %241 = vmatpush1.msra.mxu0 0.0
    %242 = vmatprep.subr.mxu0 0.0
    %243 = vmatpush1.msra.mxu0 0.0
    %244 = vmatprep.subr.mxu0 0.0
    %245 = vmatpush1.msra.mxu0 0.0
    %246 = vmatprep.subr.mxu0 0.0
    %247 = vmatpush1.msra.mxu0 0.0
    %248 = vmatprep.subr.mxu0 0.0
    %249 = vmatpush1.msra.mxu0 0.0
    %250 = vmatprep.subr.mxu0 0.0
    %251 = vmatpush1.msra.mxu0 0.0
    %252 = vmatprep.subr.mxu0 0.0
    %253 = vmatpush1.msra.mxu0 0.0
    %254 = vmatprep.subr.mxu0 0.0
    %255 = vmatpush1.msra.mxu0 0.0
    %256 = vmatprep.subr.mxu0 0.0
    %257 = vmatpush1.msra.mxu0 0.0
    %258 = vmatprep.subr.mxu0 0.0
    %259 = vmatpush1.msra.mxu0 0.0
    %260 = vmatprep.subr.mxu0 0.0
    %261 = vmatpush1.msra.mxu0 0.0
    %262 = vmatprep.subr.mxu0 0.0
    %263 = vmatpush1.msra.mxu0 0.0
    %264 = vmatprep.subr.mxu0 0.0
    %265 = vmatpush1.msra.mxu0 0.0
    %266 = vmatprep.subr.mxu0 0.0
    %267 = vmatpush1.msra.mxu0 0.0
    %268 = vmatprep.mubr.f32.mxu0 0.0
    %269 = vmatmul.mubr.f32.gmra.mrb[0].mxu0 %v180
    %v270 = vpop.f32.mrb[0].mxu0
    %v271 = vadd.f32 %v202, %v270
    %v272 = vpop.f32.mrb[0].mxu0
    %273 = vdwg.mxu0
    %v274 = vsub.f32 0.0, %v271
    %v275 = vmul.f32 %v274, 1.442695
    %v276 = vpow.pop %v275
    %v277 = vadd.f32 %v276, 1.0
    %v278 = vrcp.pop %v277
    %v279 = vmul.f32 1.0, %v278
    %v280 = vmul.f32 %v271, %v279
    %v281 = vld [vmem:[#allocation8] sm:$0xff]
    %v282 = vld [vmem:[#allocation8 + $0x8] sm:$0xff]
    %v283 = vld [vmem:[#allocation8 + $0x10] sm:$0xff]
    %v284 = vld [vmem:[#allocation8 + $0x18] sm:$0xff]
    %v285 = vld [vmem:[#allocation8 + $0x20] sm:$0xff]
    %v286 = vld [vmem:[#allocation8 + $0x28] sm:$0xff]
    %v287 = vld [vmem:[#allocation8 + $0x30] sm:$0xff]
    %v288 = vld [vmem:[#allocation8 + $0x38] sm:$0xff]
    %v289 = vld [vmem:[#allocation8 + $0x40] sm:$0xff]
    %v290 = vld [vmem:[#allocation8 + $0x48] sm:$0xff]
    %v291 = vld [vmem:[#allocation8 + $0x50] sm:$0xff]
    %v292 = vld [vmem:[#allocation8 + $0x58] sm:$0xff]
    %v293 = vld [vmem:[#allocation8 + $0x60] sm:$0xff]
    %v294 = vld [vmem:[#allocation8 + $0x68] sm:$0xff]
    %v295 = vld [vmem:[#allocation8 + $0x70] sm:$0xff]
    %v296 = vld [vmem:[#allocation8 + $0x78] sm:$0xff]
    %v297 = vld [vmem:[%s6] sm:$0x1]
    %v299 = vlaneseq
    %v300 = vshrl.u32 %v299, 7
    %v301 = vsub.s32 0, %v300
    %v302 = vrot.slane %v297, %v301
    %304 = vmatprep.subr.mxu0 0.0
    %305 = vmatpush1.msra.mxu0 %v281
    %306 = vmatprep.subr.mxu0 0.0
    %307 = vmatpush1.msra.mxu0 %v282
    %308 = vmatprep.subr.mxu0 0.0
    %309 = vmatpush1.msra.mxu0 %v283
    %310 = vmatprep.subr.mxu0 0.0
    %311 = vmatpush1.msra.mxu0 %v284
    %312 = vmatprep.subr.mxu0 0.0
    %313 = vmatpush1.msra.mxu0 %v285
    %314 = vmatprep.subr.mxu0 0.0
    %315 = vmatpush1.msra.mxu0 %v286
    %316 = vmatprep.subr.mxu0 0.0
    %317 = vmatpush1.msra.mxu0 %v287
    %318 = vmatprep.subr.mxu0 0.0
    %319 = vmatpush1.msra.mxu0 %v288
    %320 = vmatprep.subr.mxu0 0.0
    %321 = vmatpush1.msra.mxu0 %v289
    %322 = vmatprep.subr.mxu0 0.0
    %323 = vmatpush1.msra.mxu0 %v290
    %324 = vmatprep.subr.mxu0 0.0
    %325 = vmatpush1.msra.mxu0 %v291
    %326 = vmatprep.subr.mxu0 0.0
    %327 = vmatpush1.msra.mxu0 %v292
    %328 = vmatprep.subr.mxu0 0.0
    %329 = vmatpush1.msra.mxu0 %v293
    %330 = vmatprep.subr.mxu0 0.0
    %331 = vmatpush1.msra.mxu0 %v294
    %332 = vmatprep.subr.mxu0 0.0
    %333 = vmatpush1.msra.mxu0 %v295
    %334 = vmatprep.subr.mxu0 0.0
    %335 = vmatpush1.msra.mxu0 %v296
    %336 = vmatprep.subr.mxu0 0.0
    %337 = vmatpush1.msra.mxu0 0.0
    %338 = vmatprep.subr.mxu0 0.0
    %339 = vmatpush1.msra.mxu0 0.0
    %340 = vmatprep.subr.mxu0 0.0
    %341 = vmatpush1.msra.mxu0 0.0
    %342 = vmatprep.subr.mxu0 0.0
    %343 = vmatpush1.msra.mxu0 0.0
    %344 = vmatprep.subr.mxu0 0.0
    %345 = vmatpush1.msra.mxu0 0.0
    %346 = vmatprep.subr.mxu0 0.0
    %347 = vmatpush1.msra.mxu0 0.0
    %348 = vmatprep.subr.mxu0 0.0
    %349 = vmatpush1.msra.mxu0 0.0
    %350 = vmatprep.subr.mxu0 0.0
    %351 = vmatpush1.msra.mxu0 0.0
    %352 = vmatprep.subr.mxu0 0.0
    %353 = vmatpush1.msra.mxu0 0.0
    %354 = vmatprep.subr.mxu0 0.0
    %355 = vmatpush1.msra.mxu0 0.0
    %356 = vmatprep.subr.mxu0 0.0
    %357 = vmatpush1.msra.mxu0 0.0
    %358 = vmatprep.subr.mxu0 0.0
    %359 = vmatpush1.msra.mxu0 0.0
    %360 = vmatprep.subr.mxu0 0.0
    %361 = vmatpush1.msra.mxu0 0.0
    %362 = vmatprep.subr.mxu0 0.0
    %363 = vmatpush1.msra.mxu0 0.0
    %364 = vmatprep.subr.mxu0 0.0
    %365 = vmatpush1.msra.mxu0 0.0
    %366 = vmatprep.subr.mxu0 0.0
    %367 = vmatpush1.msra.mxu0 0.0
    %368 = vmatprep.mubr.f32.mxu0 0.0
    %369 = vmatmul.mubr.f32.gmra.mrb[0].mxu0 %v280
    %v370 = vpop.f32.mrb[0].mxu0
    %v371 = vadd.f32 %v302, %v370
    %v372 = vpop.f32.mrb[0].mxu0
    %373 = vdwg.mxu0
    %374 = vst [vmem:[#allocation10] sm:$0xff] %v371
    // Predicated region
    $region46: #{tpu_custom_call.1} parent=1 // pred_check
      _
    $region47: #{tpu_custom_call.1} parent=1 // pred_check_branch
      %376 = sbr.rel (0) target = $region49
    $region48: #{tpu_custom_call.1} parent=1 // pred_region
      %s378 = ssub.s32 128, 128
      %379 = vsyncadd [#allocation4], %s378
      %s381 = sshll.u32 [#allocation10], 4
      %s382 = int_to_ptr.vmem [resolvable:$true] %s381
      %384 = dma.vmem_to_hbm [thread:$0]  %s382, 128, %s7, [#allocation4]
    $region49: #{tpu_custom_call.1} parent=1 // pred_fallthru
      _
    // Predicated region
    $region50: #{tpu_custom_call.1} parent=1 // pred_check
      _
    $region51: #{tpu_custom_call.1} parent=1 // pred_check_branch
      %386 = sbr.rel (0) target = $region53
    $region52: #{tpu_custom_call.1} parent=1 // pred_region
      %387 = dma.done [#allocation4], 128
    $region53: #{tpu_custom_call.1} parent=1 // pred_fallthru
      _
    %388 = vsyncpa [#allocation3], 1
    %389 = vsyncpa [#allocation6], 1
    %390 = vsyncpa [#allocation9], 1
    %391 = vsyncpa [#allocation4], 1

</llo_original>
